<compile_context>
chip_gen: v6e
topology: v6e:2x2x1
jax: 0.10.0
libtpu: 0.0.40
codegen_flags: <defaults>
</compile_context>

<pallas_src>
import functools
import math

import jax
import jax.numpy as jnp
from jax.experimental import pallas as pl
from jax.experimental.pallas import tpu as pltpu


_MIN_TILES = 4          # keep >= this many grid steps (v7x megacore + pipelining)
_MAX_TILE_ROWS = 16384  # largest DMA tile we ever request
_MAX_CHUNK_ROWS = 1024  # in-kernel compute chunk cap (bounds Mosaic temporaries)


def _round_up(x, m):
    return ((x + m - 1) // m) * m


def _vmem_capacity_bytes():
    """Physical VMEM per TensorCore (128 MiB on v5e/v6e, 64 MiB on v7x)."""
    try:
        cap = getattr(pltpu.get_tpu_info(), "vmem_capacity_bytes", None)
        if cap:
            return int(cap)
    except Exception:
        pass
    return 64 * 1024 * 1024  # conservative fallback (v7x per-core size)


def _pick_tiling(batch, num_class, logits_dtype, tile_b=None):
    """Pick (tile_b, chunk, vmem_limit_bytes) from static shapes/dtypes only."""
    itemsize = jnp.dtype(logits_dtype).itemsize
    gran = max(8, 32 // itemsize)               # sublane granularity per dtype

    vmem_cap = _vmem_capacity_bytes()
    # Raise the old hard-coded 32 MiB limit: ~3/4 of physical, capped at 96 MiB.
    vmem_limit = int(min(vmem_cap * 3 // 4, 96 * 1024 * 1024))

    lane_c = _round_up(num_class, 128)          # lane-padded VMEM width
    # Bytes per row of ONE pipeline buffer: lane-padded logits block + the
    # packed (row, 2) -> 128-lane-padded target/alpha block.
    row_bytes = lane_c * itemsize + 128 * 4

    # Compute chunk: bounds the in-kernel temporaries (a handful of live f32
    # (chunk, lane_c) arrays), independently of the DMA tile size.
    compute_budget = 16 * 1024 * 1024
    live = 6
    chunk = max(gran, min(_MAX_CHUNK_ROWS,
                          (compute_budget // (live * lane_c * 4)) // gran * gran))

    if tile_b is not None:
        if tile_b % gran != 0:
            raise ValueError(f"tile_b must be a multiple of {gran}")
        return tile_b, math.gcd(tile_b, chunk), vmem_limit

    b_pad = _round_up(max(int(batch), 1), gran)
    # Keep >= _MIN_TILES grid steps when the batch allows it (v7x megacore
    # sharding of the "parallel" axis + DMA pipeline overlap).
    cap_rows = max(gran, _round_up(-(-b_pad // _MIN_TILES), gran))

    # DMA tile: biggest row count whose double-buffered blocks fit what is
    # left of the scoped limit after compute temporaries + misc headroom.
    buffer_budget = max(2 * gran * row_bytes,
                        vmem_limit - compute_budget - 8 * 1024 * 1024)
    tile = _MAX_TILE_ROWS
    while tile > gran and 2 * tile * row_bytes > buffer_budget:
        tile //= 2
    tile = max(gran, min(tile, cap_rows, b_pad))
    if tile >= chunk:
        tile = max(chunk, (tile // chunk) * chunk)   # tile must be a chunk multiple
    else:
        chunk = tile
    return tile, chunk, vmem_limit


def _nll_kernel(logits_ref, side_ref, part_ref, *, num_class, batch, tile_b, chunk):
    i = pl.program_id(0)
    part_ref[...] = jnp.zeros_like(part_ref)

    def chunk_body(c, carry):
        r0 = pl.multiple_of(c * chunk, chunk)
        row_base = i * tile_b + r0

        # Skip chunks lying entirely past the true batch (ragged last tile).
        @pl.when(row_base < batch)
        def _():
            x = logits_ref[pl.ds(r0, chunk), :].astype(jnp.float32)   # (chunk, C)
            tgt = side_ref[pl.ds(r0, chunk), 0:1].astype(jnp.int32)   # (chunk, 1)
            alpha = side_ref[pl.ds(r0, chunk), 1:2]                   # (chunk, 1)

            # log-softmax pieces; every reduce is over the class (lane) axis.
            m = jnp.max(x, axis=-1, keepdims=True)
            z = x - m
            lse = jnp.log(jnp.sum(jnp.exp(z), axis=-1, keepdims=True))
            # S = sum_c log_softmax(x) = sum_c z - C * lse
            s_all = jnp.sum(z, axis=-1, keepdims=True) - num_class * lse
            # log_softmax at the target class: select + reduce (no gather,
            # no onehot multiply).
            class_ids = jax.lax.broadcasted_iota(jnp.int32, (chunk, num_class), 1)
            lp_t = jnp.sum(jnp.where(class_ids == tgt, z, 0.0),
                           axis=-1, keepdims=True) - lse

            # sum_c logp*smooth == alpha*lp_t + (1-alpha)/(C-1)*(S - lp_t)
            beta = (1.0 - alpha) * (1.0 / (num_class - 1))
            per_row = alpha * lp_t + beta * (s_all - lp_t)            # (chunk, 1)

            # Rows past the true batch: SELECT (not multiply) so NaN/Inf from
            # unspecified OOB reads cannot propagate; done before the store.
            row_ids = row_base + jax.lax.broadcasted_iota(jnp.int32, (chunk, 1), 0)
            per_row = jnp.where(row_ids < batch, per_row, 0.0)

            part_ref[...] = part_ref[...] + jnp.sum(per_row)

        return carry

    jax.lax.fori_loop(0, tile_b // chunk, chunk_body, 0)


def nll_smooth_loss(outputs, targets, alpha, *, tile_b=None):
    """Pallas equivalent of NLLLoss.forward(outputs, targets, alpha).

    outputs: (B, C) logits, f32 or bf16 (bf16 on the wire halves HBM traffic;
             all in-kernel math is f32).
    targets: (B,) or (B, 1) integer class ids, must lie in [0, C).
    alpha:   scalar, (B,), or (B, 1) smoothing factor.
    """
    batch, num_class = outputs.shape
    if num_class < 2:
        raise ValueError("label smoothing requires num_class >= 2")

    tile_b, chunk, vmem_limit = _pick_tiling(batch, num_class, outputs.dtype, tile_b)

    # Pack per-row target + alpha into one lane-packed f32 operand:
    #   side[:, 0] = target (exact in f32 for C < 2**24), side[:, 1] = alpha.
    tgt_f = targets.reshape(batch).astype(jnp.float32)
    alpha_arr = jnp.asarray(alpha, jnp.float32)
    alpha_arr = jnp.broadcast_to(
        alpha_arr if alpha_arr.ndim == 0 else alpha_arr.reshape(-1), (batch,))
    side = jnp.stack([tgt_f, alpha_arr], axis=-1)                    # (B, 2) f32

    # The big (B, C) logits array is NOT padded; the ragged last tile is
    # masked in-kernel.  Only the degenerate batch < tile_b case pads (tiny).
    rows = batch
    if tile_b > batch:
        pad = tile_b - batch
        outputs = jnp.pad(outputs, ((0, pad), (0, 0)))
        side = jnp.pad(side, ((0, pad), (0, 0)))
        rows = tile_b
    num_tiles = pl.cdiv(rows, tile_b)

    kernel = functools.partial(
        _nll_kernel, num_class=num_class, batch=batch, tile_b=tile_b, chunk=chunk)

    partials = pl.pallas_call(
        kernel,
        out_shape=jax.ShapeDtypeStruct((num_tiles, 1, 128), jnp.float32),
        grid_spec=pltpu.PrefetchScalarGridSpec(
            num_scalar_prefetch=0,
            grid=(num_tiles,),
            in_specs=[
                pl.BlockSpec((tile_b, num_class), lambda i: (i, 0)),  # logits
                pl.BlockSpec((tile_b, 2), lambda i: (i, 0)),          # target+alpha
            ],
            out_specs=pl.BlockSpec((1, 1, 128), lambda i: (i, 0, 0)),
        ),
        compiler_params=pltpu.CompilerParams(
            dimension_semantics=("parallel",),
            vmem_limit_bytes=vmem_limit,
        ),
    )(outputs, side)

    # Tiny finalize outside the kernel keeps the grid fully parallel.
    return -jnp.sum(partials[:, 0, 0]) / batch


def _reference(outputs, targets, alpha):
    """Plain-JAX mirror of the PyTorch forward, for validation."""
    b, c = outputs.shape
    onehot = jax.nn.one_hot(targets, c, dtype=jnp.float32)
    a = jnp.asarray(alpha, jnp.float32)
    a = jnp.broadcast_to(a if a.ndim == 0 else a.reshape(b, 1), (b, 1))
    smooth = a * onehot + (1.0 - a) / (c - 1) * (1.0 - onehot)
    logp = jax.nn.log_softmax(outputs.astype(jnp.float32), axis=-1)
    return -jnp.mean(jnp.sum(logp * smooth, axis=-1))


if __name__ == "__main__":
    key = jax.random.PRNGKey(0)
    k0, k1, k2, k3, k4 = jax.random.split(key, 5)

    # Small shapes from the ALASCA setting; odd batch -> ragged last tile.
    batch, num_class = 13, 16
    outputs = jax.random.normal(k0, (batch, num_class), dtype=jnp.float32)
    targets = jax.random.randint(k1, (batch,), 0, num_class, dtype=jnp.int32)
    alpha = jax.random.uniform(k2, (batch, 1), dtype=jnp.float32)

    # Per-sample alpha (the ALASCA usage), forced tile_b=8 -> 2 grid tiles.
    loss = jax.block_until_ready(nll_smooth_loss(outputs, targets, alpha, tile_b=8))
    ref = _reference(outputs, targets, alpha)
    assert jnp.allclose(loss, ref, rtol=1e-5, atol=1e-5), (loss, ref)

    # Scalar alpha (also supported by the module), auto tile size.
    loss_s = jax.block_until_ready(nll_smooth_loss(outputs, targets, 0.7))
    ref_s = _reference(outputs, targets, 0.7)
    assert jnp.allclose(loss_s, ref_s, rtol=1e-5, atol=1e-5), (loss_s, ref_s)

    # Still-small case exercising the multi-chunk inner loop, the ragged last
    # tile and whole-chunk skipping (tile_b=2048 -> two 1024-row chunks/tile,
    # second tile only partially valid).
    batch2 = 2600
    outputs2 = jax.random.normal(k3, (batch2, num_class), dtype=jnp.float32)
    targets2 = jax.random.randint(k4, (batch2,), 0, num_class, dtype=jnp.int32)
    loss2 = jax.block_until_ready(
        nll_smooth_loss(outputs2, targets2, 0.9, tile_b=2048))
    ref2 = _reference(outputs2, targets2, 0.9)
    assert jnp.allclose(loss2, ref2, rtol=1e-4, atol=1e-5), (loss2, ref2)

    print("KERNEL_OK")
</pallas_src>

<mosaic_0001>
module attributes {stable_mosaic.version = 11 : i64} {
  func.func @_nll_kernel(%arg0: i32, %arg1: memref<8x16xf32, #tpu.memory_space<vmem>>, %arg2: memref<8x2xf32, #tpu.memory_space<vmem>>, %arg3: memref<1x1x128xf32, #tpu.memory_space<vmem>>) attributes {dimension_semantics = [#tpu.dimension_semantics<parallel>], iteration_bounds = array<i64: 2>, scalar_prefetch = 0 : i64, scratch_operands = 0 : i64, tpu.core_type = #tpu.core_type<tc>, window_params = [{transform_indices = @transform_0, window_bounds = array<i64: 8, 16>}, {transform_indices = @transform_1, window_bounds = array<i64: 8, 2>}, {transform_indices = @transform_2, window_bounds = array<i64: 1, 1, 128>}]} {
    %cst = arith.constant 0.000000e+00 : f32
    %0 = vector.broadcast %cst : f32 to vector<1x1x128xf32>
    %c0 = arith.constant 0 : index
    %c0_0 = arith.constant 0 : index
    %c0_1 = arith.constant 0 : index
    %1 = vector.load %arg3[%c0, %c0_0, %c0_1] : memref<1x1x128xf32, #tpu.memory_space<vmem>>, vector<1x1x128xf32>
    tpu.vector_store %arg3[%c0, %c0_0, %c0_1], %0 {strides = array<i32>} : memref<1x1x128xf32, #tpu.memory_space<vmem>>, vector<1x1x128xf32>,
    %c0_i32 = arith.constant 0 : i32
    %c8_i32 = arith.constant 8 : i32
    %2 = arith.muli %c0_i32, %c8_i32 : i32
    %3 = tpu.assume_multiple %2, 8 : i32
    %c8_i32_2 = arith.constant 8 : i32
    %4 = arith.muli %arg0, %c8_i32_2 : i32
    %5 = arith.addi %4, %3 : i32
    %c13_i32 = arith.constant 13 : i32
    %6 = arith.cmpi slt, %5, %c13_i32 : i32
    %7 = arith.extui %6 : i1 to i32
    %c0_i32_3 = arith.constant 0 : i32
    %8 = arith.cmpi ne, %7, %c0_i32_3 : i32
    scf.if %8 {
      %9 = arith.index_cast %3 : i32 to index
      %c0_4 = arith.constant 0 : index
      %10 = vector.load %arg1[%9, %c0_4] : memref<8x16xf32, #tpu.memory_space<vmem>>, vector<8x16xf32>
      %11 = arith.index_cast %3 : i32 to index
      %c0_5 = arith.constant 0 : index
      %12 = vector.load %arg2[%11, %c0_5] : memref<8x2xf32, #tpu.memory_space<vmem>>, vector<8x1xf32>
      %13 = arith.fptosi %12 : vector<8x1xf32> to vector<8x1xi32>
      %14 = arith.index_cast %3 : i32 to index
      %c1 = arith.constant 1 : index
      %15 = vector.load %arg2[%14, %c1] : memref<8x2xf32, #tpu.memory_space<vmem>>, vector<8x1xf32>
      %cst_6 = arith.constant dense<0xFF800000> : vector<8xf32>
      %16 = vector.multi_reduction <maximumf>, %10, %cst_6 [1] : vector<8x16xf32> to vector<8xf32>
      %17 = vector.shape_cast %16 : vector<8xf32> to vector<8x1xf32>
      %18 = vector.broadcast %17 : vector<8x1xf32> to vector<8x16xf32>
      %19 = arith.subf %10, %18 : vector<8x16xf32>
      %20 = math.exp %19 : vector<8x16xf32>
      %cst_7 = arith.constant dense<0.000000e+00> : vector<8xf32>
      %21 = vector.multi_reduction <add>, %20, %cst_7 [1] : vector<8x16xf32> to vector<8xf32>
      %22 = vector.shape_cast %21 : vector<8xf32> to vector<8x1xf32>
      %23 = math.log %22 : vector<8x1xf32>
      %cst_8 = arith.constant dense<0.000000e+00> : vector<8xf32>
      %24 = vector.multi_reduction <add>, %19, %cst_8 [1] : vector<8x16xf32> to vector<8xf32>
      %25 = vector.shape_cast %24 : vector<8xf32> to vector<8x1xf32>
      %cst_9 = arith.constant 1.600000e+01 : f32
      %26 = vector.broadcast %cst_9 : f32 to vector<8x1xf32>
      %27 = arith.mulf %26, %23 : vector<8x1xf32>
      %28 = arith.subf %25, %27 : vector<8x1xf32>
      %29 = tpu.iota {dimensions = array<i32: 1>} : vector<8x16xi32>
      %30 = vector.broadcast %13 : vector<8x1xi32> to vector<8x16xi32>
      %31 = arith.cmpi eq, %29, %30 : vector<8x16xi32>
      %cst_10 = arith.constant 0.000000e+00 : f32
      %32 = vector.broadcast %cst_10 : f32 to vector<8x16xf32>
      %33 = arith.select %31, %19, %32 : vector<8x16xi1>, vector<8x16xf32>
      %cst_11 = arith.constant dense<0.000000e+00> : vector<8xf32>
      %34 = vector.multi_reduction <add>, %33, %cst_11 [1] : vector<8x16xf32> to vector<8xf32>
      %35 = vector.shape_cast %34 : vector<8xf32> to vector<8x1xf32>
      %36 = arith.subf %35, %23 : vector<8x1xf32>
      %cst_12 = arith.constant 1.000000e+00 : f32
      %37 = vector.broadcast %cst_12 : f32 to vector<8x1xf32>
      %38 = arith.subf %37, %15 : vector<8x1xf32>
      %cst_13 = arith.constant 0.0666666701 : f32
      %39 = vector.broadcast %cst_13 : f32 to vector<8x1xf32>
      %40 = arith.mulf %38, %39 : vector<8x1xf32>
      %41 = arith.mulf %15, %36 : vector<8x1xf32>
      %42 = arith.subf %28, %36 : vector<8x1xf32>
      %43 = arith.mulf %40, %42 : vector<8x1xf32>
      %44 = arith.addf %41, %43 : vector<8x1xf32>
      %45 = tpu.iota {dimensions = array<i32: 0>} : vector<8x1xi32>
      %46 = vector.broadcast %5 : i32 to vector<8x1xi32>
      %47 = arith.addi %46, %45 : vector<8x1xi32>
      %c13_i32_14 = arith.constant 13 : i32
      %48 = vector.broadcast %c13_i32_14 : i32 to vector<8x1xi32>
      %49 = arith.cmpi slt, %47, %48 : vector<8x1xi32>
      %cst_15 = arith.constant 0.000000e+00 : f32
      %50 = vector.broadcast %cst_15 : f32 to vector<8x1xf32>
      %51 = arith.select %49, %44, %50 : vector<8x1xi1>, vector<8x1xf32>
      %c0_16 = arith.constant 0 : index
      %c0_17 = arith.constant 0 : index
      %c0_18 = arith.constant 0 : index
      %52 = vector.load %arg3[%c0_16, %c0_17, %c0_18] : memref<1x1x128xf32, #tpu.memory_space<vmem>>, vector<1x1x128xf32>
      %53 = vector.shape_cast %51 : vector<8x1xf32> to vector<1x8x1xf32>
      %cst_19 = arith.constant dense<0.000000e+00> : vector<1xf32>
      %54 = vector.multi_reduction <add>, %53, %cst_19 [1, 2] : vector<1x8x1xf32> to vector<1xf32>
      %55 = vector.shape_cast %54 : vector<1xf32> to vector<1x1x1xf32>
      %56 = vector.extract %55[0, 0, 0] : f32 from vector<1x1x1xf32>
      %57 = vector.broadcast %56 : f32 to vector<1x1x128xf32>
      %58 = arith.addf %52, %57 : vector<1x1x128xf32>
      %c0_20 = arith.constant 0 : index
      %c0_21 = arith.constant 0 : index
      %c0_22 = arith.constant 0 : index
      %59 = vector.load %arg3[%c0_20, %c0_21, %c0_22] : memref<1x1x128xf32, #tpu.memory_space<vmem>>, vector<1x1x128xf32>
      tpu.vector_store %arg3[%c0_20, %c0_21, %c0_22], %58 {strides = array<i32>} : memref<1x1x128xf32, #tpu.memory_space<vmem>>, vector<1x1x128xf32>,
    } else {
    }
    %c1_i32 = arith.constant 1 : i32
    return
  }
  func.func @transform_0(%arg0: i32) -> (i32, i32) {
    %c0_i32 = arith.constant 0 : i32
    %c0_i32_0 = arith.constant 0 : i32
    return %arg0, %c0_i32 : i32, i32
  }
  func.func @transform_1(%arg0: i32) -> (i32, i32) {
    %c0_i32 = arith.constant 0 : i32
    %c0_i32_0 = arith.constant 0 : i32
    return %arg0, %c0_i32 : i32, i32
  }
  func.func @transform_2(%arg0: i32) -> (i32, i32, i32) {
    %c0_i32 = arith.constant 0 : i32
    %c0_i32_0 = arith.constant 0 : i32
    %c0_i32_1 = arith.constant 0 : i32
    return %arg0, %c0_i32, %c0_i32_0 : i32, i32, i32
  }
}

</mosaic_0001>

<llo_original>
// kernel: tpu_custom_call.1
$region0: #{tpu_custom_call.1}
  #allocation0 [shape = 'u32[]', space=smem, size = 0x4, offset = 0x4, fixed_abs, tag = 'smem constant byte address 0x4 - core index']
  #allocation1 [shape = 'u32[144,128]{1,0:T(1,128)}', space=vmem, size = 0x12000, scoped, tag = 'internal scratch']
  %s0 = inlined_call_operand.vmem [shape: f32[13,16], index: 0, kind: input, shape index: {}]
  %s1 = inlined_call_operand.vmem [shape: f32[13,2], index: 1, kind: input, shape index: {}]
  %s2 = inlined_call_operand.hbm [shape: f32[2,1,128], index: 2, kind: output, shape index: {}]
  %s3 = sld [smem:[#allocation0]]
  $region45: #{tpu_custom_call.1} parent=0
    _
  %s5 = ssub.s32 1, %s3
  %s6 = scalar_select 0, %s5, %s3
  $region1: #{tpu_custom_call.1} parent=0
    #allocation2 [shape = 'u8[1024]{0}', space=vmem, size = 0x400, scoped, tag = 'output window, operand 0']
    #allocation3 [shape = 's32[2]{0}', space=sflag, size = 0x8, scoped, tag = 'scoped memory for tpu_custom_call.1']
    %7 = vsyncpa [#allocation3], 0
    %s8 = scalar_lea.sflag [#allocation3], 1
    %9 = vsyncpa %s8, 0
    loop: start=0, step=1, limit=4
    $region2: #{tpu_custom_call.1} parent=1 // loop_pre_header
      _
    $region3: #{tpu_custom_call.1} parent=1 // loop_header
      %s11 = sphi 0, %s15
      %p12 = scmp.ge.s32.totalorder %s11, 4
      %s21 = sphi 0, %s23
      %s24 = sphi 0, %s21
      %s25 = sphi 0, %s24
      %s41 = sphi 0, %s25
      %s47 = sphi 0, %s49
      %s50 = sphi 0, %s47
      %s51 = sphi 0, %s50
      %s67 = sphi 0, %s51
      %s73 = sphi 0, %s75
      %s76 = sphi 0, %s73
      %s77 = sphi 0, %s76
      %s93 = sphi 0, %s77
    $region4: #{tpu_custom_call.1} parent=1 // loop_header_branch
      %14 = sbr.rel (%p12) target = $region8
    $region5: #{tpu_custom_call.1} parent=1 // loop_body
      %s16 = ssub.s32 %s11, 1
      %s17 = ssub.s32 %s11, 2
      %s18 = sadd.s32 %s11, 1
      %s19 = ssub.s32 %s11, %s18
      %p20 = scmp.eq.s32.totalorder %s19, 0
      %s22 = sadd.s32 %s21, 1
      %s23 = scalar_select %p20, %s21, %s22
      %p26 = pneg %p20
      %p27 = scmp.eq.s32.totalorder %s11, 1
      %p28 = por %p26, %p27
      %p29 = scmp.ne.s32.totalorder %s21, %s24
      %p30 = scmp.eq.s32.totalorder %s11, 0
      %p31 = por %p29, %p30
      %p32 = scmp.ne.s32.totalorder %s21, %s24
      %p33 = scmp.eq.s32.totalorder %s16, 1
      %p34 = por %p32, %p33
      %p35 = scmp.ne.s32.totalorder %s24, %s25
      %p36 = scmp.eq.s32.totalorder %s16, 0
      %p37 = por %p35, %p36
      %p38 = scmp.ne.s32.totalorder %s24, %s25
      %p39 = scmp.eq.s32.totalorder %s17, 1
      %p40 = por %p38, %p39
      %p42 = scmp.ne.s32.totalorder %s25, %s41
      %p43 = scmp.eq.s32.totalorder %s17, 0
      %p44 = por %p42, %p43
      %s45 = ssub.s32 %s11, %s18
      %p46 = scmp.eq.s32.totalorder %s45, 0
      %s48 = sadd.s32 %s47, 1
      %s49 = scalar_select %p46, %s47, %s48
      %p52 = pneg %p46
      %p53 = scmp.eq.s32.totalorder %s11, 1
      %p54 = por %p52, %p53
      %p55 = scmp.ne.s32.totalorder %s47, %s50
      %p56 = scmp.eq.s32.totalorder %s11, 0
      %p57 = por %p55, %p56
      %p58 = scmp.ne.s32.totalorder %s47, %s50
      %p59 = scmp.eq.s32.totalorder %s16, 1
      %p60 = por %p58, %p59
      %p61 = scmp.ne.s32.totalorder %s50, %s51
      %p62 = scmp.eq.s32.totalorder %s16, 0
      %p63 = por %p61, %p62
      %p64 = scmp.ne.s32.totalorder %s50, %s51
      %p65 = scmp.eq.s32.totalorder %s17, 1
      %p66 = por %p64, %p65
      %p68 = scmp.ne.s32.totalorder %s51, %s67
      %p69 = scmp.eq.s32.totalorder %s17, 0
      %p70 = por %p68, %p69
      %s71 = ssub.s32 %s11, %s18
      %p72 = scmp.eq.s32.totalorder %s71, 0
      %s74 = sadd.s32 %s73, 1
      %s75 = scalar_select %p72, %s73, %s74
      %p78 = pneg %p72
      %p79 = scmp.eq.s32.totalorder %s11, 1
      %p80 = por %p78, %p79
      %p81 = scmp.ne.s32.totalorder %s73, %s76
      %p82 = scmp.eq.s32.totalorder %s11, 0
      %p83 = por %p81, %p82
      %p84 = scmp.ne.s32.totalorder %s73, %s76
      %p85 = scmp.eq.s32.totalorder %s16, 1
      %p86 = por %p84, %p85
      %p87 = scmp.ne.s32.totalorder %s76, %s77
      %p88 = scmp.eq.s32.totalorder %s16, 0
      %p89 = por %p87, %p88
      %p90 = scmp.ne.s32.totalorder %s76, %s77
      %p91 = scmp.eq.s32.totalorder %s17, 1
      %p92 = por %p90, %p91
      %p94 = scmp.ne.s32.totalorder %s77, %s93
      %p95 = scmp.eq.s32.totalorder %s17, 0
      %p96 = por %p94, %p95
      %p97 = scmp.le.s32.totalorder 1, %s11
      %p98 = scmp.lt.s32.totalorder %s11, 3
      %p99 = pnand %p97, %p98
      %p100 = pneg %p99
      // Predicated region
      $region9: #{tpu_custom_call.1} parent=5 // pred_check
        _
      $region10: #{tpu_custom_call.1} parent=5 // pred_check_branch
        %102 = sbr.rel (%p99) target = $region12
      $region11: #{tpu_custom_call.1} parent=5 // pred_region
        %s103 = ssub.s32 %s11, 1
      $region12: #{tpu_custom_call.1} parent=5 // pred_fallthru
        _
      %p104 = scmp.lt.s32.totalorder %s11, 2
      // Predicated region
      $region13: #{tpu_custom_call.1} parent=5 // pred_check
        %p105 = pneg %p104
      $region14: #{tpu_custom_call.1} parent=5 // pred_check_branch
        %107 = sbr.rel (%p105) target = $region16
      $region15: #{tpu_custom_call.1} parent=5 // pred_region
        // Predicated region
        $region17: #{tpu_custom_call.1} parent=15 // pred_check
          %p108 = pneg %p31
        $region18: #{tpu_custom_call.1} parent=15 // pred_check_branch
          %110 = sbr.rel (%p108) target = $region20
        $region19: #{tpu_custom_call.1} parent=15 // pred_region
          %p111 = scmp.lt.s32.totalorder %s11, 1
          %s112 = scalar_select %p111, %s11, 1
          %s113 = smul.addr %s112, 8
          %s114 = scalar_lea.vmem %s0, %s113
        $region20: #{tpu_custom_call.1} parent=15 // pred_fallthru
          _
        // Predicated region
        $region21: #{tpu_custom_call.1} parent=15 // pred_check
          %p115 = pneg %p57
        $region22: #{tpu_custom_call.1} parent=15 // pred_check_branch
          %117 = sbr.rel (%p115) target = $region24
        $region23: #{tpu_custom_call.1} parent=15 // pred_region
          %p118 = scmp.lt.s32.totalorder %s11, 1
          %s119 = scalar_select %p118, %s11, 1
          %s120 = smul.addr %s119, 8
          %s121 = scalar_lea.vmem %s1, %s120
        $region24: #{tpu_custom_call.1} parent=15 // pred_fallthru
          _
      $region16: #{tpu_custom_call.1} parent=5 // pred_fallthru
        _
      %p122 = scmp.le.s32.totalorder 1, %s11
      %p123 = scmp.lt.s32.totalorder %s11, 3
      %p124 = pnand %p122, %p123
      %p125 = pneg %p124
      // Predicated region
      $region25: #{tpu_custom_call.1} parent=5 // pred_check
        _
      $region26: #{tpu_custom_call.1} parent=5 // pred_check_branch
        %127 = sbr.rel (%p124) target = $region28
      $region27: #{tpu_custom_call.1} parent=5 // pred_region
        %s128 = ssub.s32 %s11, 1
        %p129 = scmp.lt.s32.totalorder %s16, 1
        %s130 = scalar_select %p129, %s16, 1
        %s131 = smul.addr %s130, 8
        %s132 = scalar_lea.vmem %s0, %s131
        %p133 = pneg %p37
        %p134 = pneg %p34
        %p135 = scmp.lt.s32.totalorder %s16, 1
        %s136 = scalar_select %p135, %s16, 1
        %s137 = smul.addr %s136, 8
        %s138 = scalar_lea.vmem %s1, %s137
        %p139 = pneg %p63
        %p140 = pneg %p60
        %p141 = pneg %p89
        %p142 = pneg %p86
        %s143 = sand.u32 %s76, 1
        %s144 = scalar_lea.sflag [#allocation3], %s143
        %s145 = sand.u32 %s76, 1
        %s146 = scalar_lea.vmem [#allocation2], %s145
        %p147 = scmp.lt.s32.totalorder %s16, 1
        %s148 = scalar_select %p147, %s16, 1
        %s149 = smul.addr %s148, 8
        %s150 = scalar_lea.vmem %s0, %s149
        %p151 = scmp.lt.s32.totalorder %s16, 1
        %s152 = scalar_select %p151, %s16, 1
        %s153 = smul.addr %s152, 8
        %s154 = scalar_lea.vmem %s1, %s153
        %155 = vst [vmem:[%s146] sm:$0x1] 0.0
        %s156 = smul.u32 %s16, 8
        %s157 = sadd.s32 %s156, 0
        %p158 = scmp.lt.s32.totalorder %s157, 13
        // Predicated region
        $region29: #{tpu_custom_call.1} parent=27 // pred_check
          %p159 = pneg %p158
        $region30: #{tpu_custom_call.1} parent=27 // pred_check_branch
          %161 = sbr.rel (%p159) target = $region32
        $region31: #{tpu_custom_call.1} parent=27 // pred_region
          %v162 = vld [vmem:[%s150] sm:$0xff]
          %v163 = vld [vmem:[%s154] sm:$0xff]
          %v164 = vcvt.f32.s32.to.zero.pseudo %v163
          %vm165 = vcmask 130048
          %v166 = vsel %vm165, %v162, -inf
          %167 = vmax.xlane.f32.xlu0 %v166
          %v168 = vpop.xlane.xlu0 %167
          %v169 = vsub.f32 %v162, %v168
          %v170 = vmul.f32 %v169, 1.442695
          %v171 = vpow.pop %v170
          %v172 = vsel %vm165, %v171, 0.0
          %173 = vadd.xlane.f32.xlu0 %v172
          %v174 = vpop.xlane.xlu0 %173
          %v175 = vlog2.pop %v174
          %v176 = vmul.f32 %v175, 0.6931472
          %v177 = vsel %vm165, %v169, 0.0
          %178 = vadd.xlane.f32.xlu0 %v177
          %v179 = vpop.xlane.xlu0 %178
          %v180 = vmul.f32 %v176, 16.0
          %v181 = vsub.f32 %v179, %v180
          %v182 = vlaneseq
          %v183 = vand.u32 %v182, 127
          %184 = vset.pattern.permute.xlu0 0
          %185 = vperm.xlu0 %184, %v164
          %v186 = vpop.permute.xlu0 %185
          %vm187 = vcmp.eq.s32.totalorder %v183, %v186
          %v188 = vsel %vm187, %v169, 0.0
          %v189 = vsel %vm165, %v188, 0.0
          %190 = vadd.xlane.f32.xlu0 %v189
          %v191 = vpop.xlane.xlu0 %190
          %v192 = vsub.f32 %v191, %v176
          %v193 = vsub.f32 1.0, %v163
          %v194 = vmul.f32 %v193, 0.06666667
          %v195 = vmul.f32 %v163, %v192
          %v196 = vsub.f32 %v181, %v192
          %v197 = vmul.f32 %v194, %v196
          %v198 = vadd.f32 %v195, %v197
          %v199 = vlaneseq
          %v200 = vshrl.u32 %v199, 7
          %v201 = vstv %s157
          %v202 = vadd.s32 %v201, %v200
          %vm203 = vcmp.lt.s32.totalorder %v202, 13
          %v204 = vsel %vm203, %v198, 0.0
          %v205 = vld [vmem:[%s146] sm:$0x1]
          %207 = vrot.lane.b32.xlu0 %v204, 127
          %v208 = vpop.permute.xlu0 %207
          %vm210 = vcmask 7168
          %v211 = vsel %vm210, %v208, 0.0
          %212 = vadd.xlane.f32.xlu0 %v211
          %v213 = vpop.xlane.xlu0 %212
          %v214 = vrot.slane %v213, 4
          %v215 = vadd.f32 %v213, %v214
          %v216 = vrot.slane %v215, 2
          %v217 = vadd.f32 %v215, %v216
          %v218 = vrot.slane %v217, 1
          %v219 = vadd.f32 %v217, %v218
          %s220 = vtos %v219
          %v221 = vstv %s220
          %v222 = vadd.f32 %v205, %v221
          %223 = vst [vmem:[%s146] sm:$0x1] %v222
        $region32: #{tpu_custom_call.1} parent=27 // pred_fallthru
          _
        %s224 = sand.u32 %s76, 1
        %s225 = scalar_lea.sflag [#allocation3], %s224
        %s226 = sand.u32 %s76, 1
        %s227 = scalar_lea.vmem [#allocation2], %s226
        // Predicated region
        $region33: #{tpu_custom_call.1} parent=27 // pred_check
          %p228 = pneg %p86
        $region34: #{tpu_custom_call.1} parent=27 // pred_check_branch
          %230 = sbr.rel (%p228) target = $region36
        $region35: #{tpu_custom_call.1} parent=27 // pred_region
          %s232 = ssub.s32 16, 16
          %233 = vsyncadd %s225, %s232
          %s234 = smul.addr %s16, 16
          %s235 = scalar_lea.hbm %s2, %s234
          %s237 = sshll.u32 %s227, 4
          %s238 = int_to_ptr.vmem [resolvable:$true] %s237
          %240 = dma.vmem_to_hbm [thread:$0]  %s238, 16, %s235, %s225
        $region36: #{tpu_custom_call.1} parent=27 // pred_fallthru
          _
      $region28: #{tpu_custom_call.1} parent=5 // pred_fallthru
        _
      %p241 = scmp.le.s32.totalorder 2, %s11
      // Predicated region
      $region37: #{tpu_custom_call.1} parent=5 // pred_check
        %p242 = pneg %p241
      $region38: #{tpu_custom_call.1} parent=5 // pred_check_branch
        %244 = sbr.rel (%p242) target = $region40
      $region39: #{tpu_custom_call.1} parent=5 // pred_region
        %s245 = ssub.s32 %s11, 2
        // Predicated region
        $region41: #{tpu_custom_call.1} parent=39 // pred_check
          %p246 = pneg %p92
        $region42: #{tpu_custom_call.1} parent=39 // pred_check_branch
          %248 = sbr.rel (%p246) target = $region44
        $region43: #{tpu_custom_call.1} parent=39 // pred_region
          %s249 = sand.u32 %s77, 1
          %s250 = scalar_lea.sflag [#allocation3], %s249
          %s251 = sand.u32 %s77, 1
          %s252 = scalar_lea.vmem [#allocation2], %s251
          %253 = dma.done %s250, 16
        $region44: #{tpu_custom_call.1} parent=39 // pred_fallthru
          _
      $region40: #{tpu_custom_call.1} parent=5 // pred_fallthru
        _
    $region6: #{tpu_custom_call.1} parent=1 // loop_footer
      %s15 = sadd.s32 1, %s11
    $region7: #{tpu_custom_call.1} parent=1 // loop_footer_branch
      %10 = sbr.rel target = $region3
    $region8: #{tpu_custom_call.1} parent=1 // loop_exit
      _
    %254 = vsyncpa [#allocation3], 1
    %s255 = scalar_lea.sflag [#allocation3], 1
    %256 = vsyncpa %s255, 1

</llo_original>
